<compile_context>
chip_gen: v5e
topology: v5e:2x2
jax: 0.10.0
libtpu: 0.0.40
codegen_flags: <defaults>
</compile_context>

<pallas_src>
import functools

import jax
import jax.numpy as jnp
from jax import lax
from jax.experimental import pallas as pl
from jax.experimental.pallas import tpu as pltpu

LANES = 128
SUBLANES = 8


def _simse_kernel(pred_ref, real_ref, part_ref, *, rows, tile, chunk, steps):
    """Grid = (cores, steps). part_ref is this core's resident (1,8,128) partial."""
    c = pl.program_id(0)          # core axis ("parallel")
    i = pl.program_id(1)          # reduction axis ("arbitrary")
    b = c * steps + i             # nominal global row-block index (unclamped)

    @pl.when(i == 0)
    def _():
        part_ref[...] = jnp.zeros_like(part_ref)

    n_chunks = tile // chunk

    def accumulate(masked):
        def body(k, acc):
            start = pl.multiple_of(k * chunk, chunk)
            d = (pred_ref[pl.ds(start, chunk), :].astype(jnp.float32)
                 - real_ref[pl.ds(start, chunk), :].astype(jnp.float32))
            if masked:
                row_idx = (lax.broadcasted_iota(jnp.int32, (chunk, LANES), 0)
                           + b * tile + k * chunk)
                d = jnp.where(row_idx < rows, d, jnp.float32(0.0))
            # Pure VPU vreg adds: fold the chunk down to one (8,128) partial.
            return acc + jnp.sum(d.reshape(chunk // SUBLANES, SUBLANES, LANES),
                                 axis=0)

        return lax.fori_loop(0, n_chunks, body,
                             jnp.zeros((SUBLANES, LANES), jnp.float32),
                             unroll=True)

    # Only blocks that overhang `rows` (the globally last, partial block and
    # any fully-redundant clamped blocks of the dummy core range) pay the
    # iota+compare+select cost.
    tail_block = (b + 1) * tile > rows

    @pl.when(jnp.logical_not(tail_block))
    def _():
        part_ref[0] += accumulate(masked=False)

    @pl.when(tail_block)
    def _():
        part_ref[0] += accumulate(masked=True)


def simse(pred, real, *, row_tile=4096, chunk_rows=512):
    assert pred.shape == real.shape, "pred/real must have the same shape"
    n = int(pred.size)  # numel, static

    itemsize = jnp.dtype(pred.dtype).itemsize
    # Minimum sublane multiple for the input dtype (8 f32, 16 bf16, 32 int8).
    sub = max(SUBLANES, 32 // max(itemsize, 1))

    pred_flat = jnp.ravel(pred)
    real_flat = jnp.ravel(real)

    rows = n // LANES
    main = rows * LANES
    inv_n = 1.0 / float(n)

    # Sub-128 lane tail (< 128 elements): fold into the scalar in plain JAX —
    # never pad-copy the whole input.
    tail_sum = jnp.float32(0.0)
    if main < n:
        tail_sum = jnp.sum(pred_flat[main:].astype(jnp.float32)
                           - real_flat[main:].astype(jnp.float32))

    if rows < sub:
        # Tiny input: not even one full (sub, 128) tile — pure-JAX fallback.
        s = tail_sum
        if rows > 0:
            s = s + jnp.sum(pred_flat[:main].astype(jnp.float32)
                            - real_flat[:main].astype(jnp.float32))
        return (s * jnp.float32(inv_n)) ** 2

    if main < n:
        pred_slab = pred_flat[:main].reshape(rows, LANES)
        real_slab = real_flat[:main].reshape(rows, LANES)
    else:
        pred_slab = pred_flat.reshape(rows, LANES)  # free: metadata-only reshape
        real_slab = real_flat.reshape(rows, LANES)

    def round_up(a, m):
        return ((a + m - 1) // m) * m

    # Chunk: in-kernel reduction granularity (keeps the f32 diff temp small).
    chunk = max(sub, round_up(min(int(chunk_rows), rows), sub))
    # Tile: rows per grid step / DMA block — as large as requested.
    tile = max(chunk, round_up(min(int(row_tile), rows), chunk))

    blocks_total = -(-rows // tile)
    last_block = blocks_total - 1
    # TODO(synk): query the actual TensorCore count (pltpu.get_tpu_info) instead
    # of a fixed 2-way split; 2 is correct everywhere and a no-op on v5e/v6e.
    ncores = 1 if blocks_total == 1 else 2
    steps = -(-blocks_total // ncores)
    need_mask = (rows % tile != 0) or (blocks_total % ncores != 0)  # doc only

    def in_map(c, i):
        # Clamp so dummy blocks of an uneven core split never DMA out of
        # bounds; their contribution is zeroed by the in-kernel row mask.
        return (jnp.minimum(c * steps + i, last_block), 0)

    kernel = functools.partial(
        _simse_kernel, rows=rows, tile=tile, chunk=chunk, steps=steps
    )

    partials = pl.pallas_call(
        kernel,
        out_shape=jax.ShapeDtypeStruct((ncores, SUBLANES, LANES), jnp.float32),
        grid_spec=pltpu.PrefetchScalarGridSpec(
            num_scalar_prefetch=0,
            grid=(ncores, steps),
            in_specs=[
                pl.BlockSpec((tile, LANES), in_map),
                pl.BlockSpec((tile, LANES), in_map),
            ],
            out_specs=pl.BlockSpec((1, SUBLANES, LANES), lambda c, i: (c, 0, 0)),
        ),
        compiler_params=pltpu.CompilerParams(
            dimension_semantics=("parallel", "arbitrary"),
            vmem_limit_bytes=32 * 1024 * 1024,
        ),
        cost_estimate=pl.CostEstimate(
            flops=2 * n,
            transcendentals=0,
            bytes_accessed=2 * n * itemsize + ncores * SUBLANES * LANES * 4,
        ),
    )(pred_slab, real_slab)

    s = jnp.sum(partials) + tail_sum          # single tiny cross-lane reduce
    scaled = s * jnp.float32(inv_n)           # (s / n)^2 — safer than s^2 / n^2
    return scaled * scaled


if __name__ == "__main__":
    key = jax.random.PRNGKey(0)
    k1, k2, k3, k4 = jax.random.split(key, 4)

    simse_fn = jax.jit(simse, static_argnames=("row_tile", "chunk_rows"))

    # Case 1: lane-aligned NCHW-like shape, typical use of this loss.
    shape = (2, 4, 16, 16)                     # n = 2048 -> 16 rows, no tail
    pred = jax.random.normal(k1, shape, dtype=jnp.float32)
    real = jax.random.normal(k2, shape, dtype=jnp.float32)
    result = jax.block_until_ready(simse_fn(pred, real))
    n = pred.size
    ref = jnp.sum(pred - real) ** 2 / (n ** 2)
    assert jnp.allclose(result, ref, rtol=1e-5, atol=1e-6), (result, ref)

    # Case 2: ragged shape -> 95-element lane tail + partial final row block +
    # 2-way core split + multi-block grid (exercises mask gating & clamping).
    shape2 = (3, 5, 37, 29)                    # n = 16095 -> 125 rows + tail 95
    real2 = jax.random.normal(k3, shape2, dtype=jnp.float32)
    pred2 = real2 + 0.1 * jax.random.normal(k4, shape2, dtype=jnp.float32) + 0.05
    result2 = jax.block_until_ready(simse_fn(pred2, real2, row_tile=16, chunk_rows=8))
    n2 = pred2.size
    ref2 = jnp.sum(pred2 - real2) ** 2 / (n2 ** 2)
    assert jnp.allclose(result2, ref2, rtol=1e-4, atol=1e-7), (result2, ref2)

    print("KERNEL_OK")
</pallas_src>

<mosaic_0001>
module attributes {stable_mosaic.version = 11 : i64} {
  func.func @_simse_kernel(%arg0: i32, %arg1: i32, %arg2: memref<16x128xf32, #tpu.memory_space<vmem>>, %arg3: memref<16x128xf32, #tpu.memory_space<vmem>>, %arg4: memref<1x8x128xf32, #tpu.memory_space<vmem>>) attributes {dimension_semantics = [#tpu.dimension_semantics<parallel>, #tpu.dimension_semantics<arbitrary>], iteration_bounds = array<i64: 1, 1>, scalar_prefetch = 0 : i64, scratch_operands = 0 : i64, tpu.core_type = #tpu.core_type<tc>, window_params = [{transform_indices = @transform_0, window_bounds = array<i64: 16, 128>}, {transform_indices = @transform_1, window_bounds = array<i64: 16, 128>}, {transform_indices = @transform_2, window_bounds = array<i64: 1, 8, 128>}]} {
    %c1_i32 = arith.constant 1 : i32
    %0 = arith.muli %arg0, %c1_i32 : i32
    %1 = arith.addi %0, %arg1 : i32
    %c0_i32 = arith.constant 0 : i32
    %2 = arith.cmpi eq, %arg1, %c0_i32 : i32
    %3 = arith.extui %2 : i1 to i32
    %c0_i32_0 = arith.constant 0 : i32
    %4 = arith.cmpi ne, %3, %c0_i32_0 : i32
    scf.if %4 {
      %cst = arith.constant 0.000000e+00 : f32
      %13 = vector.broadcast %cst : f32 to vector<1x8x128xf32>
      %c0 = arith.constant 0 : index
      %c0_5 = arith.constant 0 : index
      %c0_6 = arith.constant 0 : index
      %14 = vector.load %arg4[%c0, %c0_5, %c0_6] : memref<1x8x128xf32, #tpu.memory_space<vmem>>, vector<1x8x128xf32>
      tpu.vector_store %arg4[%c0, %c0_5, %c0_6], %13 {strides = array<i32>} : memref<1x8x128xf32, #tpu.memory_space<vmem>>, vector<1x8x128xf32>,
    } else {
    }
    %c1_i32_1 = arith.constant 1 : i32
    %5 = arith.addi %1, %c1_i32_1 : i32
    %c16_i32 = arith.constant 16 : i32
    %6 = arith.muli %5, %c16_i32 : i32
    %c16_i32_2 = arith.constant 16 : i32
    %7 = arith.cmpi sgt, %6, %c16_i32_2 : i32
    %true = arith.constant true
    %8 = arith.xori %7, %true : i1
    %9 = arith.extui %8 : i1 to i32
    %c0_i32_3 = arith.constant 0 : i32
    %10 = arith.cmpi ne, %9, %c0_i32_3 : i32
    scf.if %10 {
      %c0 = arith.constant 0 : index
      %c0_5 = arith.constant 0 : index
      %c0_6 = arith.constant 0 : index
      %13 = vector.load %arg4[%c0, %c0_5, %c0_6] : memref<1x8x128xf32, #tpu.memory_space<vmem>>, vector<1x8x128xf32>
      %14 = vector.shape_cast %13 : vector<1x8x128xf32> to vector<8x128xf32>
      %cst = arith.constant 0.000000e+00 : f32
      %15 = vector.broadcast %cst : f32 to vector<8x128xf32>
      %c0_i32_7 = arith.constant 0 : i32
      %c16_i32_8 = arith.constant 16 : i32
      %16 = arith.muli %c0_i32_7, %c16_i32_8 : i32
      %17 = tpu.assume_multiple %16, 16 : i32
      %18 = arith.index_cast %17 : i32 to index
      %c0_9 = arith.constant 0 : index
      %19 = vector.load %arg2[%18, %c0_9] : memref<16x128xf32, #tpu.memory_space<vmem>>, vector<16x128xf32>
      %20 = arith.index_cast %17 : i32 to index
      %c0_10 = arith.constant 0 : index
      %21 = vector.load %arg3[%20, %c0_10] : memref<16x128xf32, #tpu.memory_space<vmem>>, vector<16x128xf32>
      %22 = arith.subf %19, %21 : vector<16x128xf32>
      %23 = vector.shape_cast %22 : vector<16x128xf32> to vector<2x8x128xf32>
      %cst_11 = arith.constant dense<0.000000e+00> : vector<8x128xf32>
      %24 = vector.multi_reduction <add>, %23, %cst_11 [0] : vector<2x8x128xf32> to vector<8x128xf32>
      %25 = arith.addf %15, %24 : vector<8x128xf32>
      %c1_i32_12 = arith.constant 1 : i32
      %26 = arith.addf %14, %25 : vector<8x128xf32>
      %c0_13 = arith.constant 0 : index
      %c0_14 = arith.constant 0 : index
      %c0_15 = arith.constant 0 : index
      %27 = vector.load %arg4[%c0_13, %c0_14, %c0_15] : memref<1x8x128xf32, #tpu.memory_space<vmem>>, vector<1x8x128xf32>
      %28 = vector.shape_cast %27 : vector<1x8x128xf32> to vector<8x128xf32>
      %29 = vector.shape_cast %26 : vector<8x128xf32> to vector<1x8x128xf32>
      tpu.vector_store %arg4[%c0_13, %c0_14, %c0_15], %29 {strides = array<i32>} : memref<1x8x128xf32, #tpu.memory_space<vmem>>, vector<1x8x128xf32>,
    } else {
    }
    %11 = arith.extui %7 : i1 to i32
    %c0_i32_4 = arith.constant 0 : i32
    %12 = arith.cmpi ne, %11, %c0_i32_4 : i32
    scf.if %12 {
      %c0 = arith.constant 0 : index
      %c0_5 = arith.constant 0 : index
      %c0_6 = arith.constant 0 : index
      %13 = vector.load %arg4[%c0, %c0_5, %c0_6] : memref<1x8x128xf32, #tpu.memory_space<vmem>>, vector<1x8x128xf32>
      %14 = vector.shape_cast %13 : vector<1x8x128xf32> to vector<8x128xf32>
      %cst = arith.constant 0.000000e+00 : f32
      %15 = vector.broadcast %cst : f32 to vector<8x128xf32>
      %c0_i32_7 = arith.constant 0 : i32
      %c16_i32_8 = arith.constant 16 : i32
      %16 = arith.muli %c0_i32_7, %c16_i32_8 : i32
      %17 = tpu.assume_multiple %16, 16 : i32
      %18 = arith.index_cast %17 : i32 to index
      %c0_9 = arith.constant 0 : index
      %19 = vector.load %arg2[%18, %c0_9] : memref<16x128xf32, #tpu.memory_space<vmem>>, vector<16x128xf32>
      %20 = arith.index_cast %17 : i32 to index
      %c0_10 = arith.constant 0 : index
      %21 = vector.load %arg3[%20, %c0_10] : memref<16x128xf32, #tpu.memory_space<vmem>>, vector<16x128xf32>
      %22 = arith.subf %19, %21 : vector<16x128xf32>
      %23 = tpu.iota {dimensions = array<i32: 0>} : vector<16x128xi32>
      %c16_i32_11 = arith.constant 16 : i32
      %24 = arith.muli %1, %c16_i32_11 : i32
      %25 = vector.broadcast %24 : i32 to vector<16x128xi32>
      %26 = arith.addi %23, %25 : vector<16x128xi32>
      %c16_i32_12 = arith.constant 16 : i32
      %27 = arith.muli %c0_i32_7, %c16_i32_12 : i32
      %28 = vector.broadcast %27 : i32 to vector<16x128xi32>
      %29 = arith.addi %26, %28 : vector<16x128xi32>
      %c16_i32_13 = arith.constant 16 : i32
      %30 = vector.broadcast %c16_i32_13 : i32 to vector<16x128xi32>
      %31 = arith.cmpi slt, %29, %30 : vector<16x128xi32>
      %cst_14 = arith.constant 0.000000e+00 : f32
      %32 = vector.broadcast %cst_14 : f32 to vector<16x128xf32>
      %33 = arith.select %31, %22, %32 : vector<16x128xi1>, vector<16x128xf32>
      %34 = vector.shape_cast %33 : vector<16x128xf32> to vector<2x8x128xf32>
      %cst_15 = arith.constant dense<0.000000e+00> : vector<8x128xf32>
      %35 = vector.multi_reduction <add>, %34, %cst_15 [0] : vector<2x8x128xf32> to vector<8x128xf32>
      %36 = arith.addf %15, %35 : vector<8x128xf32>
      %c1_i32_16 = arith.constant 1 : i32
      %37 = arith.addf %14, %36 : vector<8x128xf32>
      %c0_17 = arith.constant 0 : index
      %c0_18 = arith.constant 0 : index
      %c0_19 = arith.constant 0 : index
      %38 = vector.load %arg4[%c0_17, %c0_18, %c0_19] : memref<1x8x128xf32, #tpu.memory_space<vmem>>, vector<1x8x128xf32>
      %39 = vector.shape_cast %38 : vector<1x8x128xf32> to vector<8x128xf32>
      %40 = vector.shape_cast %37 : vector<8x128xf32> to vector<1x8x128xf32>
      tpu.vector_store %arg4[%c0_17, %c0_18, %c0_19], %40 {strides = array<i32>} : memref<1x8x128xf32, #tpu.memory_space<vmem>>, vector<1x8x128xf32>,
    } else {
    }
    return
  }
  func.func @transform_0(%arg0: i32, %arg1: i32) -> (i32, i32) {
    %c1_i32 = arith.constant 1 : i32
    %0 = arith.muli %arg0, %c1_i32 : i32
    %1 = arith.addi %0, %arg1 : i32
    %c0_i32 = arith.constant 0 : i32
    %2 = arith.minsi %1, %c0_i32 : i32
    %c0_i32_0 = arith.constant 0 : i32
    %c0_i32_1 = arith.constant 0 : i32
    return %2, %c0_i32_0 : i32, i32
  }
  func.func @transform_1(%arg0: i32, %arg1: i32) -> (i32, i32) {
    %c1_i32 = arith.constant 1 : i32
    %0 = arith.muli %arg0, %c1_i32 : i32
    %1 = arith.addi %0, %arg1 : i32
    %c0_i32 = arith.constant 0 : i32
    %2 = arith.minsi %1, %c0_i32 : i32
    %c0_i32_0 = arith.constant 0 : i32
    %c0_i32_1 = arith.constant 0 : i32
    return %2, %c0_i32_0 : i32, i32
  }
  func.func @transform_2(%arg0: i32, %arg1: i32) -> (i32, i32, i32) {
    %c0_i32 = arith.constant 0 : i32
    %c0_i32_0 = arith.constant 0 : i32
    %c0_i32_1 = arith.constant 0 : i32
    return %arg0, %c0_i32, %c0_i32_0 : i32, i32, i32
  }
}

</mosaic_0001>

<llo_original>
// kernel: simse.1
$region0: #{simse.1}
  #allocation0 [shape = 'u32[]', space=smem, size = 0x4, offset = 0x4, fixed_abs, tag = 'smem constant byte address 0x4 - core index']
  #allocation1 [shape = 'u32[72,128]{1,0:T(1,128)}', space=vmem, size = 0x9000, scoped, tag = 'internal scratch']
  %s0 = inlined_call_operand.vmem [shape: f32[16,128], index: 0, kind: input, shape index: {}]
  %s1 = inlined_call_operand.vmem [shape: f32[16,128], index: 1, kind: input, shape index: {}]
  %s2 = inlined_call_operand.vmem [shape: f32[1,8,128], index: 2, kind: output, shape index: {}]
  %s3 = sld [smem:[#allocation0]]
  $region30: #{simse.1} parent=0
    _
  %s5 = ssub.s32 1, %s3
  %s6 = scalar_select 0, %s5, %s3
  // Predicated region
  $region2: #{simse.1} parent=0 // pred_check
    _
  $region3: #{simse.1} parent=0 // pred_check_branch
    %8 = sbr.rel (0) target = $region5
  $region4: #{simse.1} parent=0 // pred_region
    %s9 = sadd.s32 0, 0
    %p10 = scmp.lt.s32.totalorder %s9, 0
    %s11 = scalar_select %p10, %s9, 0
    %s12 = smul.u32 2, %s11
    %p13 = scmp.lt.s32.totalorder %s12, 1
    %s14 = scalar_select %p13, %s12, 1
    %s15 = smul.addr %s14, 8
    %s16 = scalar_lea.vmem %s0, %s15
    %s17 = sadd.s32 0, 0
    %p18 = scmp.lt.s32.totalorder %s17, 0
    %s19 = scalar_select %p18, %s17, 0
    %s20 = smul.u32 2, %s19
  $region5: #{simse.1} parent=0 // pred_fallthru
    _
  // Predicated region
  $region6: #{simse.1} parent=0 // pred_check
    _
  $region7: #{simse.1} parent=0 // pred_check_branch
    %22 = sbr.rel (0) target = $region9
  $region8: #{simse.1} parent=0 // pred_region
    %s23 = sadd.s32 0, 0
    %p24 = scmp.lt.s32.totalorder %s23, 0
    %s25 = scalar_select %p24, %s23, 0
    %s26 = smul.u32 2, %s25
    %p27 = scmp.lt.s32.totalorder %s26, 1
    %s28 = scalar_select %p27, %s26, 1
    %s29 = smul.addr %s28, 8
    %s30 = scalar_lea.vmem %s1, %s29
    %s31 = sadd.s32 0, 0
    %p32 = scmp.lt.s32.totalorder %s31, 0
    %s33 = scalar_select %p32, %s31, 0
    %s34 = smul.u32 2, %s33
  $region9: #{simse.1} parent=0 // pred_fallthru
    _
  %s35 = sadd.s32 0, 0
  %p36 = scmp.lt.s32.totalorder %s35, 0
  %s37 = scalar_select %p36, %s35, 0
  %s38 = smul.u32 2, %s37
  %p39 = scmp.lt.s32.totalorder %s38, 1
  %s40 = scalar_select %p39, %s38, 1
  %s41 = smul.addr %s40, 8
  %s42 = scalar_lea.vmem %s0, %s41
  %s43 = sadd.s32 0, 0
  %p44 = scmp.lt.s32.totalorder %s43, 0
  %s45 = scalar_select %p44, %s43, 0
  %s46 = smul.u32 2, %s45
  %p47 = scmp.lt.s32.totalorder %s46, 1
  %s48 = scalar_select %p47, %s46, 1
  %s49 = smul.addr %s48, 8
  %s50 = scalar_lea.vmem %s1, %s49
  %s51 = sadd.s32 0, 0
  %p52 = scmp.lt.s32.totalorder %s51, 0
  %s53 = scalar_select %p52, %s51, 0
  %s54 = smul.u32 2, %s53
  %p55 = scmp.lt.s32.totalorder %s54, 1
  %s56 = scalar_select %p55, %s54, 1
  %s57 = smul.addr %s56, 8
  %s58 = scalar_lea.vmem %s0, %s57
  %s59 = sadd.s32 0, 0
  %p60 = scmp.lt.s32.totalorder %s59, 0
  %s61 = scalar_select %p60, %s59, 0
  %s62 = smul.u32 2, %s61
  %s63 = sadd.s32 0, 0
  %p64 = scmp.lt.s32.totalorder %s63, 0
  %s65 = scalar_select %p64, %s63, 0
  %s66 = smul.u32 2, %s65
  %p67 = scmp.lt.s32.totalorder %s66, 1
  %s68 = scalar_select %p67, %s66, 1
  %s69 = smul.addr %s68, 8
  %s70 = scalar_lea.vmem %s1, %s69
  %s71 = sadd.s32 0, 0
  %p72 = scmp.lt.s32.totalorder %s71, 0
  %s73 = scalar_select %p72, %s71, 0
  %s74 = smul.u32 2, %s73
  %s75 = sadd.s32 0, 0
  %p76 = scmp.eq.s32.totalorder 0, 0
  // Predicated region
  $region10: #{simse.1} parent=0 // pred_check
    %p77 = pneg %p76
  $region11: #{simse.1} parent=0 // pred_check_branch
    %79 = sbr.rel (%p77) target = $region13
  $region12: #{simse.1} parent=0 // pred_region
    %80 = vst [vmem:[%s2] sm:$0xff] 0.0
  $region13: #{simse.1} parent=0 // pred_fallthru
    _
  %s81 = sadd.s32 %s75, 1
  %s82 = smul.u32 %s81, 16
  %p83 = scmp.gt.s32.totalorder %s82, 16
  %p84 = scmp.le.s32.totalorder %s82, 16
  // Predicated region
  $region14: #{simse.1} parent=0 // pred_check
    %p85 = pneg %p84
  $region15: #{simse.1} parent=0 // pred_check_branch
    %87 = sbr.rel (%p85) target = $region17
  $region16: #{simse.1} parent=0 // pred_region
    %v88 = vld [vmem:[%s2] sm:$0xff]
    %v89 = vld [vmem:[%s58] sm:$0xff]
    %v90 = vld [vmem:[%s58 + $0x8] sm:$0xff]
    %v91 = vld [vmem:[%s70] sm:$0xff]
    %v92 = vld [vmem:[%s70 + $0x8] sm:$0xff]
    %v93 = vsub.f32 %v89, %v91
    %v94 = vsub.f32 %v90, %v92
    %v95 = vadd.f32 %v93, %v94
    %v96 = vadd.f32 %v95, 0.0
    %v97 = vadd.f32 %v88, %v96
    %98 = vst [vmem:[%s2] sm:$0xff] %v97
  $region17: #{simse.1} parent=0 // pred_fallthru
    _
  // Predicated region
  $region18: #{simse.1} parent=0 // pred_check
    %p99 = pneg %p83
  $region19: #{simse.1} parent=0 // pred_check_branch
    %101 = sbr.rel (%p99) target = $region21
  $region20: #{simse.1} parent=0 // pred_region
    %v102 = vld [vmem:[%s2] sm:$0xff]
    %v103 = vld [vmem:[%s58] sm:$0xff]
    %v104 = vld [vmem:[%s58 + $0x8] sm:$0xff]
    %v105 = vld [vmem:[%s70] sm:$0xff]
    %v106 = vld [vmem:[%s70 + $0x8] sm:$0xff]
    %v107 = vsub.f32 %v103, %v105
    %v108 = vsub.f32 %v104, %v106
    %v109 = vlaneseq
    %v110 = vshrl.u32 %v109, 7
    %v111 = vadd.s32 %v110, 8
    %s112 = smul.u32 %s75, 16
    %v113 = vstv %s112
    %v114 = vadd.s32 %v110, %v113
    %v115 = vadd.s32 %v111, %v113
    %vm116 = vcmp.lt.s32.totalorder %v114, 16
    %vm117 = vcmp.lt.s32.totalorder %v115, 16
    %v118 = vsel %vm116, %v107, 0.0
    %v119 = vsel %vm117, %v108, 0.0
    %v120 = vadd.f32 %v118, %v119
    %v121 = vadd.f32 %v120, 0.0
    %v122 = vadd.f32 %v102, %v121
    %123 = vst [vmem:[%s2] sm:$0xff] %v122
  $region21: #{simse.1} parent=0 // pred_fallthru
    _
  // Predicated region
  $region22: #{simse.1} parent=0 // pred_check
    _
  $region23: #{simse.1} parent=0 // pred_check_branch
    %125 = sbr.rel (0) target = $region25
  $region24: #{simse.1} parent=0 // pred_region
    _
  $region25: #{simse.1} parent=0 // pred_fallthru
    _
  // Predicated region
  $region26: #{simse.1} parent=0 // pred_check
    _
  $region27: #{simse.1} parent=0 // pred_check_branch
    %127 = sbr.rel (0) target = $region29
  $region28: #{simse.1} parent=0 // pred_region
    _
  $region29: #{simse.1} parent=0 // pred_fallthru
    _

</llo_original>
